<compile_context>
chip_gen: v6e
topology: v6e:2x2x1
jax: 0.10.0
libtpu: 0.0.40
codegen_flags: <defaults>
</compile_context>

<pallas_src>
import math

import jax
import jax.numpy as jnp
from jax.experimental import pallas as pl
from jax.experimental.pallas import tpu as pltpu


def _round_up(v, m):
    return (v + m - 1) // m * m


def _pick_tn(h_pad):
    # Largest MXU-aligned lane tile that divides the (128-padded) hidden dim.
    for cand in (512, 256, 128):
        if h_pad % cand == 0:
            return cand
    return 128  # unreachable: h_pad is always a multiple of 128


# ----------------------------------------------------------------------------
# Kernel
# ----------------------------------------------------------------------------
def _residual_linear_kernel(x_ref, w_ref, b_ref, o_ref, acc_ref):
    # x_ref: (TM, TK)  w_ref: (TK, TN)  b_ref: (1, TN) f32  o_ref: (TM, TN)
    # acc_ref: (TM, TN) f32 scratch, persistent across the K sweep.
    j = pl.program_id(1)
    k = pl.program_id(2)

    @pl.when(k == 0)
    def _init():
        acc_ref[...] = jnp.zeros_like(acc_ref)

    acc_ref[...] += jnp.dot(
        x_ref[...], w_ref[...], preferred_element_type=jnp.float32
    )

    # Residual add: TN == TK, so when k == j the x tile (i, k) already in VMEM
    # is exactly the (i, j) block of x needed for the residual — no extra DMA.
    @pl.when(k == j)
    def _residual():
        acc_ref[...] += x_ref[...].astype(jnp.float32)

    @pl.when(k == pl.num_programs(2) - 1)
    def _finalize():
        o_ref[...] = (acc_ref[...] + b_ref[...]).astype(o_ref.dtype)


# ----------------------------------------------------------------------------
# Parameter preparation (hoisted out of the hot path — do this once)
# ----------------------------------------------------------------------------
def prepare_residual_linear(w_t, b, *, compute_dtype=None):
    """Pad + cast the Linear parameters once.

    w_t : [hidden, hidden]  (transposed nn.Linear weight, i.e. W.T)
    b   : [hidden]
    compute_dtype : dtype fed to the MXU (e.g. jnp.bfloat16).  None keeps
                    w_t.dtype.  Accumulation is always f32.
    Returns (w_padded, bias_2d_f32, hidden).
    """
    hidden = w_t.shape[0]
    assert w_t.shape == (hidden, hidden), "sub-layer must be Linear(hidden, hidden)"
    assert b.shape == (hidden,)

    h_pad = _round_up(hidden, 128)
    cdt = compute_dtype if compute_dtype is not None else w_t.dtype

    w_p = w_t.astype(cdt)
    b_p = b.astype(jnp.float32)
    if h_pad != hidden:
        # Zero padding keeps the matmul exact; padded cols are sliced off later.
        w_p = jnp.pad(w_p, ((0, h_pad - hidden), (0, h_pad - hidden)))
        b_p = jnp.pad(b_p, (0, h_pad - hidden))
    b2d = b_p.reshape(1, h_pad)
    return w_p, b2d, hidden


# ----------------------------------------------------------------------------
# Wrapper
# ----------------------------------------------------------------------------
def residual_linear_padded(x, w_p, b2d, hidden, *, tm_max=1024):
    """out = x + (x @ W^T + b) with pre-padded / pre-cast parameters."""
    orig_shape = x.shape
    assert orig_shape[-1] == hidden

    out_dtype = x.dtype
    cdt = w_p.dtype                      # compute dtype decided at prepare time
    h_pad = w_p.shape[0]

    m = math.prod(orig_shape[:-1]) if len(orig_shape) > 1 else 1
    x2d = x.reshape(m, hidden).astype(cdt)

    itemsize = jnp.dtype(cdt).itemsize
    sublane = 8 if itemsize >= 4 else 16

    # --- tile selection -----------------------------------------------------
    tn = _pick_tn(h_pad)                                   # lane tile (N and K)
    tm = min(tm_max, _round_up(m, sublane))                # row tile (free)
    m_pad = _round_up(m, tm)

    # v7x has 2 TensorCores: make sure the parallel (M, N) grid has >= 2 tiles
    # whenever the N axis can still be split (no-op on v5e/v6e single-TC).
    while (m_pad // tm) * (h_pad // tn) < 2 and tn >= 256:
        tn //= 2
    tk = tn

    # Residual-fusion invariants (zero runtime cost, prevents silent breakage).
    assert tn == tk, "k==j residual fusion requires TN == TK"
    assert m_pad % tm == 0 and h_pad % tn == 0 and h_pad % tk == 0

    grid = (m_pad // tm, h_pad // tn, h_pad // tk)   # K must stay the LAST axis
    dim_semantics = ("parallel", "parallel", "arbitrary")
    assert len(grid) == 3 and dim_semantics[-1] == "arbitrary"

    if m_pad != m or h_pad != hidden:
        x2d = jnp.pad(x2d, ((0, m_pad - m), (0, h_pad - hidden)))

    # --- VMEM budget (double-buffered operands + f32 accumulator) ------------
    osize = jnp.dtype(out_dtype).itemsize
    vmem_need = (
        2 * tm * tk * itemsize      # x, double-buffered
        + 2 * tk * tn * itemsize    # W^T, double-buffered
        + 2 * tm * tn * osize       # out, double-buffered
        + tm * tn * 4               # f32 accumulator scratch
        + 2 * tn * 4                # bias
    )
    # Headroom for Mosaic, capped at 48 MiB (safe on v7x's 64 MiB VMEM).
    vmem_limit = int(min(max(2 * vmem_need, 32 * 1024 * 1024), 48 * 1024 * 1024))

    out2d = pl.pallas_call(
        _residual_linear_kernel,
        out_shape=jax.ShapeDtypeStruct((m_pad, h_pad), out_dtype),
        grid_spec=pltpu.PrefetchScalarGridSpec(
            num_scalar_prefetch=0,
            grid=grid,
            in_specs=[
                pl.BlockSpec((tm, tk), lambda i, j, k: (i, k)),   # x
                pl.BlockSpec((tk, tn), lambda i, j, k: (k, j)),   # W^T
                pl.BlockSpec((1, tn), lambda i, j, k: (0, j)),    # bias (f32)
            ],
            out_specs=pl.BlockSpec((tm, tn), lambda i, j, k: (i, j)),
            scratch_shapes=[pltpu.VMEM((tm, tn), jnp.float32)],
        ),
        compiler_params=pltpu.CompilerParams(
            dimension_semantics=dim_semantics,
            vmem_limit_bytes=vmem_limit,
        ),
    )(x2d, w_p, b2d)

    return out2d[:m, :hidden].reshape(orig_shape)


def residual_linear(x, w_t, b, *, tm_max=1024, compute_dtype=None):
    """Convenience one-shot wrapper: out = x + (x @ w_t + b).

    For repeated calls, use prepare_residual_linear() once and
    residual_linear_padded() per call (avoids re-padding W every step).
    """
    w_p, b2d, hidden = prepare_residual_linear(w_t, b, compute_dtype=compute_dtype)
    return residual_linear_padded(x, w_p, b2d, hidden, tm_max=tm_max)


def reference(x, w_t, b):
    # Pure-JAX reference of Residual(Linear): x + x @ W^T + b
    return x + (jnp.einsum("...h,ho->...o", x, w_t) + b)


# ----------------------------------------------------------------------------
# Tests / demo
# ----------------------------------------------------------------------------
if __name__ == "__main__":
    key = jax.random.PRNGKey(0)
    kx, kw, kb = jax.random.split(key, 3)

    # --- small shape consistent with the module (exact f32 path) -------------
    batch, seq, hidden = 2, 8, 32
    x = jax.random.normal(kx, (batch, seq, hidden), dtype=jnp.float32)
    # PyTorch nn.Linear weight is (out, in); we pass its transpose (in, out).
    w = jax.random.normal(kw, (hidden, hidden), dtype=jnp.float32) * 0.05
    b = jax.random.normal(kb, (hidden,), dtype=jnp.float32) * 0.01

    out = jax.block_until_ready(residual_linear(x, w.T, b))
    ref = reference(x, w.T, b)
    assert out.shape == x.shape
    assert jnp.allclose(out, ref, atol=1e-4, rtol=1e-4), "mismatch (small, f32)"

    # --- tiled grid, f32 exact path (exercises 2-TC N-split: tn 512 -> 256) --
    b2_, s2, h2 = 4, 128, 512   # m = 512, hidden = 512
    x2 = jax.random.normal(kx, (b2_, s2, h2), dtype=jnp.float32)
    w2 = jax.random.normal(kw, (h2, h2), dtype=jnp.float32) * (1.0 / h2 ** 0.5)
    b2v = jax.random.normal(kb, (h2,), dtype=jnp.float32) * 0.01

    out2 = jax.block_until_ready(residual_linear(x2, w2.T, b2v))
    ref2 = reference(x2, w2.T, b2v)
    assert out2.shape == x2.shape
    assert jnp.allclose(out2, ref2, atol=2e-2, rtol=2e-2), "mismatch (tiled, f32)"

    # --- large-ish shape on the bf16 fast path (tm=1024, tn=tk=512) ----------
    b3, s3, h3 = 2, 1024, 1024  # m = 2048
    x3 = jax.random.normal(kx, (b3, s3, h3), dtype=jnp.float32)
    w3 = jax.random.normal(kw, (h3, h3), dtype=jnp.float32) * (1.0 / h3 ** 0.5)
    b3v = jax.random.normal(kb, (h3,), dtype=jnp.float32) * 0.01

    w3_p, b3_2d, h3_ = prepare_residual_linear(
        w3.T, b3v, compute_dtype=jnp.bfloat16)       # pad + cast once
    out3 = jax.block_until_ready(
        residual_linear_padded(x3, w3_p, b3_2d, h3_, tm_max=1024))
    ref3 = reference(x3, w3.T, b3v)
    assert out3.shape == x3.shape
    assert jnp.allclose(out3, ref3, atol=5e-2, rtol=5e-2), "mismatch (bf16 path)"

    print("KERNEL_OK")
</pallas_src>

<mosaic_0001>
module attributes {stable_mosaic.version = 11 : i64} {
  func.func @_residual_linear_kernel(%arg0: i32, %arg1: i32, %arg2: i32, %arg3: memref<16x128xf32, #tpu.memory_space<vmem>>, %arg4: memref<128x128xf32, #tpu.memory_space<vmem>>, %arg5: memref<1x128xf32, #tpu.memory_space<vmem>>, %arg6: memref<16x128xf32, #tpu.memory_space<vmem>>, %arg7: memref<16x128xf32, #tpu.memory_space<vmem>>) attributes {dimension_semantics = [#tpu.dimension_semantics<parallel>, #tpu.dimension_semantics<parallel>, #tpu.dimension_semantics<arbitrary>], iteration_bounds = array<i64: 1, 1, 1>, scalar_prefetch = 0 : i64, scratch_operands = 1 : i64, tpu.core_type = #tpu.core_type<tc>, window_params = [{transform_indices = @transform_0, window_bounds = array<i64: 16, 128>}, {transform_indices = @transform_1, window_bounds = array<i64: 128, 128>}, {transform_indices = @transform_2, window_bounds = array<i64: 1, 128>}, {transform_indices = @transform_3, window_bounds = array<i64: 16, 128>}]} {
    %c0_i32 = arith.constant 0 : i32
    %0 = arith.cmpi eq, %arg2, %c0_i32 : i32
    %1 = arith.extui %0 : i1 to i32
    %c0_i32_0 = arith.constant 0 : i32
    %2 = arith.cmpi ne, %1, %c0_i32_0 : i32
    scf.if %2 {
      %cst_11 = arith.constant 0.000000e+00 : f32
      %15 = vector.broadcast %cst_11 : f32 to vector<16x128xf32>
      %c0_12 = arith.constant 0 : index
      %c0_13 = arith.constant 0 : index
      %16 = vector.load %arg7[%c0_12, %c0_13] : memref<16x128xf32, #tpu.memory_space<vmem>>, vector<16x128xf32>
      tpu.vector_store %arg7[%c0_12, %c0_13], %15 {strides = array<i32>} : memref<16x128xf32, #tpu.memory_space<vmem>>, vector<16x128xf32>,
    } else {
    }
    %c0 = arith.constant 0 : index
    %c0_1 = arith.constant 0 : index
    %3 = vector.load %arg7[%c0, %c0_1] : memref<16x128xf32, #tpu.memory_space<vmem>>, vector<16x128xf32>
    %c0_2 = arith.constant 0 : index
    %c0_3 = arith.constant 0 : index
    %4 = vector.load %arg3[%c0_2, %c0_3] : memref<16x128xf32, #tpu.memory_space<vmem>>, vector<16x128xf32>
    %c0_4 = arith.constant 0 : index
    %c0_5 = arith.constant 0 : index
    %5 = vector.load %arg4[%c0_4, %c0_5] : memref<128x128xf32, #tpu.memory_space<vmem>>, vector<128x128xf32>
    %cst = arith.constant dense<0.000000e+00> : vector<16x128xf32>
    %6 = tpu.matmul %4, %5, %cst {dimension_numbers = #tpu.dot_dimension_numbers<[1], [0], [0], [1], [0, 0, 1, 1], [], []>} : vector<16x128xf32>, vector<128x128xf32>, vector<16x128xf32> -> vector<16x128xf32>
    %7 = arith.addf %3, %6 : vector<16x128xf32>
    %c0_6 = arith.constant 0 : index
    %c0_7 = arith.constant 0 : index
    %8 = vector.load %arg7[%c0_6, %c0_7] : memref<16x128xf32, #tpu.memory_space<vmem>>, vector<16x128xf32>
    tpu.vector_store %arg7[%c0_6, %c0_7], %7 {strides = array<i32>} : memref<16x128xf32, #tpu.memory_space<vmem>>, vector<16x128xf32>,
    %9 = arith.cmpi eq, %arg2, %arg1 : i32
    %10 = arith.extui %9 : i1 to i32
    %c0_i32_8 = arith.constant 0 : i32
    %11 = arith.cmpi ne, %10, %c0_i32_8 : i32
    scf.if %11 {
      %c0_11 = arith.constant 0 : index
      %c0_12 = arith.constant 0 : index
      %15 = vector.load %arg7[%c0_11, %c0_12] : memref<16x128xf32, #tpu.memory_space<vmem>>, vector<16x128xf32>
      %c0_13 = arith.constant 0 : index
      %c0_14 = arith.constant 0 : index
      %16 = vector.load %arg3[%c0_13, %c0_14] : memref<16x128xf32, #tpu.memory_space<vmem>>, vector<16x128xf32>
      %17 = arith.addf %15, %16 : vector<16x128xf32>
      %c0_15 = arith.constant 0 : index
      %c0_16 = arith.constant 0 : index
      %18 = vector.load %arg7[%c0_15, %c0_16] : memref<16x128xf32, #tpu.memory_space<vmem>>, vector<16x128xf32>
      tpu.vector_store %arg7[%c0_15, %c0_16], %17 {strides = array<i32>} : memref<16x128xf32, #tpu.memory_space<vmem>>, vector<16x128xf32>,
    } else {
    }
    %c0_i32_9 = arith.constant 0 : i32
    %12 = arith.cmpi eq, %arg2, %c0_i32_9 : i32
    %13 = arith.extui %12 : i1 to i32
    %c0_i32_10 = arith.constant 0 : i32
    %14 = arith.cmpi ne, %13, %c0_i32_10 : i32
    scf.if %14 {
      %c0_11 = arith.constant 0 : index
      %c0_12 = arith.constant 0 : index
      %15 = vector.load %arg7[%c0_11, %c0_12] : memref<16x128xf32, #tpu.memory_space<vmem>>, vector<16x128xf32>
      %c0_13 = arith.constant 0 : index
      %c0_14 = arith.constant 0 : index
      %16 = vector.load %arg5[%c0_13, %c0_14] : memref<1x128xf32, #tpu.memory_space<vmem>>, vector<1x128xf32>
      %17 = vector.broadcast %16 : vector<1x128xf32> to vector<16x128xf32>
      %18 = arith.addf %15, %17 : vector<16x128xf32>
      %c0_15 = arith.constant 0 : index
      %c0_16 = arith.constant 0 : index
      %19 = vector.load %arg6[%c0_15, %c0_16] : memref<16x128xf32, #tpu.memory_space<vmem>>, vector<16x128xf32>
      tpu.vector_store %arg6[%c0_15, %c0_16], %18 {strides = array<i32>} : memref<16x128xf32, #tpu.memory_space<vmem>>, vector<16x128xf32>,
    } else {
    }
    return
  }
  func.func @transform_0(%arg0: i32, %arg1: i32, %arg2: i32) -> (i32, i32) {
    %c0_i32 = arith.constant 0 : i32
    return %arg0, %arg2 : i32, i32
  }
  func.func @transform_1(%arg0: i32, %arg1: i32, %arg2: i32) -> (i32, i32) {
    %c0_i32 = arith.constant 0 : i32
    return %arg2, %arg1 : i32, i32
  }
  func.func @transform_2(%arg0: i32, %arg1: i32, %arg2: i32) -> (i32, i32) {
    %c0_i32 = arith.constant 0 : i32
    %c0_i32_0 = arith.constant 0 : i32
    return %c0_i32, %arg1 : i32, i32
  }
  func.func @transform_3(%arg0: i32, %arg1: i32, %arg2: i32) -> (i32, i32) {
    %c0_i32 = arith.constant 0 : i32
    return %arg0, %arg1 : i32, i32
  }
}

</mosaic_0001>

<llo_original>
// kernel: tpu_custom_call.1
$region0: #{tpu_custom_call.1}
  #allocation0 [shape = 'u32[]', space=smem, size = 0x4, offset = 0x4, fixed_abs, tag = 'smem constant byte address 0x4 - core index']
  #allocation1 [shape = 'u32[144,128]{1,0:T(1,128)}', space=vmem, size = 0x12000, scoped, tag = 'internal scratch']
  #allocation2 [shape = 'f32[16,128]{1,0:T(8,128)}', space=vmem, size = 0x2000, scoped, tag = 'scratch operand']
  %s0 = inlined_call_operand.hbm [shape: f32[16,128], index: 0, kind: input, shape index: {}]
  %s1 = inlined_call_operand.hbm [shape: f32[128,128], index: 1, kind: input, shape index: {}]
  %s2 = inlined_call_operand.vmem [shape: f32[1,128], index: 2, kind: input, shape index: {}]
  %s3 = inlined_call_operand.hbm [shape: f32[16,128], index: 3, kind: output, shape index: {}]
  %s4 = sld [smem:[#allocation0]]
  $region42: #{tpu_custom_call.1} parent=0
    _
  %s6 = ssub.s32 1, %s4
  %s7 = scalar_select 0, %s6, %s4
  $region1: #{tpu_custom_call.1} parent=0
    #allocation3 [shape = 'u8[8192]{0}', space=vmem, size = 0x2000, scoped, tag = 'input window, operand 0, single buffered']
    #allocation4 [shape = 's32[1]{0}', space=sflag, size = 0x4, scoped, tag = 'scoped memory for tpu_custom_call.1']
    #allocation5 [shape = 's32[1]{0}', space=sflag, size = 0x4, scoped, tag = 'scoped memory for tpu_custom_call.1']
    #allocation6 [shape = 'u8[65536]{0}', space=vmem, size = 0x10000, scoped, tag = 'input window, operand 1, single buffered']
    #allocation7 [shape = 's32[1]{0}', space=sflag, size = 0x4, scoped, tag = 'scoped memory for tpu_custom_call.1']
    #allocation8 [shape = 'u8[8192]{0}', space=vmem, size = 0x2000, scoped, tag = 'output window, operand 0, single buffered']
    %8 = vsyncpa [#allocation4], 0
    %9 = vsyncpa [#allocation7], 0
    %10 = vsyncpa [#allocation5], 0
    // Predicated region
    $region2: #{tpu_custom_call.1} parent=1 // pred_check
      _
    $region3: #{tpu_custom_call.1} parent=1 // pred_check_branch
      %12 = sbr.rel (0) target = $region5
    $region4: #{tpu_custom_call.1} parent=1 // pred_region
      %s14 = ssub.s32 256, 256
      %15 = vsyncadd [#allocation4], %s14
      %s16 = sshll.u32 [#allocation3], 4
      %s17 = int_to_ptr.vmem [resolvable:$true] %s16
      %22 = dma.hbm_to_vmem [thread:$0]  %s0, 256, %s17, [#allocation4], 128, 128, 8
    $region5: #{tpu_custom_call.1} parent=1 // pred_fallthru
      _
    // Predicated region
    $region6: #{tpu_custom_call.1} parent=1 // pred_check
      _
    $region7: #{tpu_custom_call.1} parent=1 // pred_check_branch
      %24 = sbr.rel (0) target = $region9
    $region8: #{tpu_custom_call.1} parent=1 // pred_region
      %s26 = ssub.s32 2048, 2048
      %27 = vsyncadd [#allocation7], %s26
      %s28 = sshll.u32 [#allocation6], 4
      %s29 = int_to_ptr.vmem [resolvable:$true] %s28
      %34 = dma.hbm_to_vmem [thread:$0]  %s1, 2048, %s29, [#allocation7], 128, 128, 8
    $region9: #{tpu_custom_call.1} parent=1 // pred_fallthru
      _
    // Predicated region
    $region10: #{tpu_custom_call.1} parent=1 // pred_check
      _
    $region11: #{tpu_custom_call.1} parent=1 // pred_check_branch
      %36 = sbr.rel (0) target = $region13
    $region12: #{tpu_custom_call.1} parent=1 // pred_region
      _
    $region13: #{tpu_custom_call.1} parent=1 // pred_fallthru
      _
    // Predicated region
    $region14: #{tpu_custom_call.1} parent=1 // pred_check
      _
    $region15: #{tpu_custom_call.1} parent=1 // pred_check_branch
      %38 = sbr.rel (0) target = $region17
    $region16: #{tpu_custom_call.1} parent=1 // pred_region
      %39 = dma.done [#allocation4], 256
    $region17: #{tpu_custom_call.1} parent=1 // pred_fallthru
      _
    // Predicated region
    $region18: #{tpu_custom_call.1} parent=1 // pred_check
      _
    $region19: #{tpu_custom_call.1} parent=1 // pred_check_branch
      %41 = sbr.rel (0) target = $region21
    $region20: #{tpu_custom_call.1} parent=1 // pred_region
      %42 = dma.done [#allocation7], 2048
    $region21: #{tpu_custom_call.1} parent=1 // pred_fallthru
      _
    %p43 = scmp.eq.s32.totalorder 0, 0
    // Predicated region
    $region22: #{tpu_custom_call.1} parent=1 // pred_check
      %p44 = pneg %p43
    $region23: #{tpu_custom_call.1} parent=1 // pred_check_branch
      %46 = sbr.rel (%p44) target = $region25
    $region24: #{tpu_custom_call.1} parent=1 // pred_region
      %47 = vst [vmem:[#allocation2] sm:$0xff] 0.0
      %48 = vst [vmem:[#allocation2 + $0x8] sm:$0xff] 0.0
    $region25: #{tpu_custom_call.1} parent=1 // pred_fallthru
      _
    %v49 = vld [vmem:[#allocation2] sm:$0xff]
    %v50 = vld [vmem:[#allocation2 + $0x8] sm:$0xff]
    %v51 = vld [vmem:[#allocation3] sm:$0xff]
    %v52 = vld [vmem:[#allocation3 + $0x8] sm:$0xff]
    %v53 = vld [vmem:[#allocation6] sm:$0xff]
    %v54 = vld [vmem:[#allocation6 + $0x8] sm:$0xff]
    %v55 = vld [vmem:[#allocation6 + $0x10] sm:$0xff]
    %v56 = vld [vmem:[#allocation6 + $0x18] sm:$0xff]
    %v57 = vld [vmem:[#allocation6 + $0x20] sm:$0xff]
    %v58 = vld [vmem:[#allocation6 + $0x28] sm:$0xff]
    %v59 = vld [vmem:[#allocation6 + $0x30] sm:$0xff]
    %v60 = vld [vmem:[#allocation6 + $0x38] sm:$0xff]
    %v61 = vld [vmem:[#allocation6 + $0x40] sm:$0xff]
    %v62 = vld [vmem:[#allocation6 + $0x48] sm:$0xff]
    %v63 = vld [vmem:[#allocation6 + $0x50] sm:$0xff]
    %v64 = vld [vmem:[#allocation6 + $0x58] sm:$0xff]
    %v65 = vld [vmem:[#allocation6 + $0x60] sm:$0xff]
    %v66 = vld [vmem:[#allocation6 + $0x68] sm:$0xff]
    %v67 = vld [vmem:[#allocation6 + $0x70] sm:$0xff]
    %v68 = vld [vmem:[#allocation6 + $0x78] sm:$0xff]
    %69 = vmatprep.subr.mxu0 0.0
    %70 = vmatpush1.msra.mxu0 %v68
    %71 = vmatprep.subr.mxu0 0.0
    %72 = vmatpush1.msra.mxu0 %v67
    %73 = vmatprep.subr.mxu0 0.0
    %74 = vmatpush1.msra.mxu0 %v66
    %75 = vmatprep.subr.mxu0 0.0
    %76 = vmatpush1.msra.mxu0 %v65
    %77 = vmatprep.subr.mxu0 0.0
    %78 = vmatpush1.msra.mxu0 %v64
    %79 = vmatprep.subr.mxu0 0.0
    %80 = vmatpush1.msra.mxu0 %v63
    %81 = vmatprep.subr.mxu0 0.0
    %82 = vmatpush1.msra.mxu0 %v62
    %83 = vmatprep.subr.mxu0 0.0
    %84 = vmatpush1.msra.mxu0 %v61
    %85 = vmatprep.subr.mxu0 0.0
    %86 = vmatpush1.msra.mxu0 %v60
    %87 = vmatprep.subr.mxu0 0.0
    %88 = vmatpush1.msra.mxu0 %v59
    %89 = vmatprep.subr.mxu0 0.0
    %90 = vmatpush1.msra.mxu0 %v58
    %91 = vmatprep.subr.mxu0 0.0
    %92 = vmatpush1.msra.mxu0 %v57
    %93 = vmatprep.subr.mxu0 0.0
    %94 = vmatpush1.msra.mxu0 %v56
    %95 = vmatprep.subr.mxu0 0.0
    %96 = vmatpush1.msra.mxu0 %v55
    %97 = vmatprep.subr.mxu0 0.0
    %98 = vmatpush1.msra.mxu0 %v54
    %99 = vmatprep.subr.mxu0 0.0
    %100 = vmatpush1.msra.mxu0 %v53
    %101 = vmatprep.subr.mxu0 0.0
    %102 = vmatpush2.msra.mxu0 0.0
    %103 = vmatprep.subr.mxu0 0.0
    %104 = vmatpush2.msra.mxu0 0.0
    %105 = vmatprep.subr.mxu0 0.0
    %106 = vmatpush2.msra.mxu0 0.0
    %107 = vmatprep.subr.mxu0 0.0
    %108 = vmatpush2.msra.mxu0 0.0
    %109 = vmatprep.subr.mxu0 0.0
    %110 = vmatpush2.msra.mxu0 0.0
    %111 = vmatprep.subr.mxu0 0.0
    %112 = vmatpush2.msra.mxu0 0.0
    %113 = vmatprep.subr.mxu0 0.0
    %114 = vmatpush2.msra.mxu0 0.0
    %115 = vmatprep.subr.mxu0 0.0
    %116 = vmatpush2.msra.mxu0 0.0
    %117 = vmatprep.subr.mxu0 0.0
    %118 = vmatpush2.msra.mxu0 0.0
    %119 = vmatprep.subr.mxu0 0.0
    %120 = vmatpush2.msra.mxu0 0.0
    %121 = vmatprep.subr.mxu0 0.0
    %122 = vmatpush2.msra.mxu0 0.0
    %123 = vmatprep.subr.mxu0 0.0
    %124 = vmatpush2.msra.mxu0 0.0
    %125 = vmatprep.subr.mxu0 0.0
    %126 = vmatpush2.msra.mxu0 0.0
    %127 = vmatprep.subr.mxu0 0.0
    %128 = vmatpush2.msra.mxu0 0.0
    %129 = vmatprep.subr.mxu0 0.0
    %130 = vmatpush2.msra.mxu0 0.0
    %131 = vmatprep.subr.mxu0 0.0
    %132 = vmatpush2.msra.mxu0 0.0
    %133 = vmatprep.mubr.f32.mxu0 0.0
    %134 = vmatmul.mubr.f32.gmra.mxu0 %v51
    %v135 = vpop.f32.mrf.mxu0
    %v136 = vadd.f32 0.0, %v135
    %v137 = vpop.f32.mrf.mxu0
    %138 = vmatprep.mubr.f32.mxu0 0.0
    %139 = vmatmul.mubr.f32.gmra.mxu0 %v52
    %v140 = vpop.f32.mrf.mxu0
    %v141 = vadd.f32 0.0, %v140
    %v142 = vpop.f32.mrf.mxu0
    %143 = vdwg.mxu0
    %v144 = vadd.f32 %v49, %v136
    %v145 = vadd.f32 %v50, %v141
    %146 = vst [vmem:[#allocation2] sm:$0xff] %v144
    %147 = vst [vmem:[#allocation2 + $0x8] sm:$0xff] %v145
    %p148 = scmp.eq.s32.totalorder 0, 0
    // Predicated region
    $region26: #{tpu_custom_call.1} parent=1 // pred_check
      %p149 = pneg %p148
    $region27: #{tpu_custom_call.1} parent=1 // pred_check_branch
      %151 = sbr.rel (%p149) target = $region29
    $region28: #{tpu_custom_call.1} parent=1 // pred_region
      %v152 = vld [vmem:[#allocation2] sm:$0xff]
      %v153 = vld [vmem:[#allocation2 + $0x8] sm:$0xff]
      %v154 = vld [vmem:[#allocation3] sm:$0xff]
      %v155 = vld [vmem:[#allocation3 + $0x8] sm:$0xff]
      %v156 = vadd.f32 %v152, %v154
      %v157 = vadd.f32 %v153, %v155
      %158 = vst [vmem:[#allocation2] sm:$0xff] %v156
      %159 = vst [vmem:[#allocation2 + $0x8] sm:$0xff] %v157
    $region29: #{tpu_custom_call.1} parent=1 // pred_fallthru
      _
    // Predicated region
    $region30: #{tpu_custom_call.1} parent=1 // pred_check
      %p160 = pneg %p43
    $region31: #{tpu_custom_call.1} parent=1 // pred_check_branch
      %162 = sbr.rel (%p160) target = $region33
    $region32: #{tpu_custom_call.1} parent=1 // pred_region
      %v163 = vld [vmem:[#allocation2] sm:$0xff]
      %v164 = vld [vmem:[#allocation2 + $0x8] sm:$0xff]
      %v165 = vld [vmem:[%s2] sm:$0x1]
      %v167 = vlaneseq
      %v168 = vshrl.u32 %v167, 7
      %v169 = vsub.s32 0, %v168
      %v170 = vrot.slane %v165, %v169
      %v172 = vadd.f32 %v163, %v170
      %v173 = vadd.f32 %v164, %v170
      %174 = vst [vmem:[#allocation8] sm:$0xff] %v172
      %175 = vst [vmem:[#allocation8 + $0x8] sm:$0xff] %v173
    $region33: #{tpu_custom_call.1} parent=1 // pred_fallthru
      _
    // Predicated region
    $region34: #{tpu_custom_call.1} parent=1 // pred_check
      _
    $region35: #{tpu_custom_call.1} parent=1 // pred_check_branch
      %177 = sbr.rel (0) target = $region37
    $region36: #{tpu_custom_call.1} parent=1 // pred_region
      %s179 = ssub.s32 256, 256
      %180 = vsyncadd [#allocation5], %s179
      %s181 = sshll.u32 [#allocation8], 4
      %s182 = int_to_ptr.vmem [resolvable:$true] %s181
      %187 = dma.vmem_to_hbm [thread:$0]  %s182, 256, %s3, [#allocation5], 128, 128, 8
    $region37: #{tpu_custom_call.1} parent=1 // pred_fallthru
      _
    // Predicated region
    $region38: #{tpu_custom_call.1} parent=1 // pred_check
      _
    $region39: #{tpu_custom_call.1} parent=1 // pred_check_branch
      %189 = sbr.rel (0) target = $region41
    $region40: #{tpu_custom_call.1} parent=1 // pred_region
      %190 = dma.done [#allocation5], 256
    $region41: #{tpu_custom_call.1} parent=1 // pred_fallthru
      _
    %191 = vsyncpa [#allocation4], 1
    %192 = vsyncpa [#allocation7], 1
    %193 = vsyncpa [#allocation5], 1

</llo_original>
